<compile_context>
chip_gen: v7x
topology: tpu7x:2x2x1
jax: 0.10.0
libtpu: 0.0.40
codegen_flags: <defaults>
</compile_context>

<pallas_src>
import functools

import jax
import jax.numpy as jnp
from jax.experimental import pallas as pl
from jax.experimental.pallas import tpu as pltpu

IN_FEATURES = 1000
OUT_FEATURES = 2

N_PAD = ((OUT_FEATURES + 127) // 128) * 128   # 2 -> 128 (lane-dense output)
TILE_B_MAX = 2048                             # rows per batch tile (f32)
VMEM_LIMIT_BYTES = 30 * 1024 * 1024           # > v5e 16 MiB default, < 32 MiB scoped


def _linear_kernel(x_ref, w_ref, b_ref, o_ref):
    # x_ref: [tile_b, 1000], w_ref: [1000, 128] (VMEM-resident, single buffer),
    # b_ref: [1, 128] f32, o_ref: [tile_b, 128]
    acc = jnp.dot(x_ref[...], w_ref[...], preferred_element_type=jnp.float32)
    o_ref[...] = (acc + b_ref[...]).astype(o_ref.dtype)


def prepare_params(weight, bias):
    """Pad/transpose torch-layout params ONCE (outside the per-call path).

    weight: [2, 1000] (PyTorch nn.Linear layout), bias: [2].
    Returns w_p [1000, 128] f32, b_p [1, 128] f32 (only N is padded; K stays 1000).
    """
    w_p = jnp.zeros((IN_FEATURES, N_PAD), jnp.float32).at[:, :OUT_FEATURES].set(
        weight.T.astype(jnp.float32)
    )
    b_p = jnp.zeros((1, N_PAD), jnp.float32).at[0, :OUT_FEATURES].set(
        bias.astype(jnp.float32)
    )
    return w_p, b_p


@functools.partial(jax.jit, static_argnames=("out_dtype",))
def linear_classification_forward(x, w_p, b_p, out_dtype=jnp.float32):
    """x: [B, 1000] f32, w_p: [1000, 128], b_p: [1, 128] (from prepare_params)."""
    B, K = x.shape
    assert K == IN_FEATURES

    # >= 2 batch tiles when B allows it (so v7x's second TensorCore gets work),
    # capped at TILE_B_MAX so the double-buffered x tile stays in scoped VMEM.
    half = -(-B // 2)
    tile_b = min(TILE_B_MAX, max(8, ((half + 7) // 8) * 8))
    grid_b = pl.cdiv(B, tile_b)   # ragged last tile handled by Pallas

    cost = pl.CostEstimate(
        flops=2 * B * IN_FEATURES * N_PAD,
        transcendentals=0,
        bytes_accessed=(
            x.size * x.dtype.itemsize
            + w_p.size * w_p.dtype.itemsize
            + b_p.size * b_p.dtype.itemsize
            + B * N_PAD * jnp.dtype(out_dtype).itemsize
        ),
    )

    out = pl.pallas_call(
        _linear_kernel,
        out_shape=jax.ShapeDtypeStruct((B, N_PAD), out_dtype),
        grid_spec=pltpu.PrefetchScalarGridSpec(
            num_scalar_prefetch=0,
            grid=(grid_b,),
            in_specs=[
                # x: one batch tile per grid step, full K (no padding, pipelined).
                pl.BlockSpec((tile_b, IN_FEATURES), lambda i: (i, 0)),
                # weight / bias: constant block -> single VMEM-resident buffer.
                pl.BlockSpec((IN_FEATURES, N_PAD), lambda i: (0, 0),
                             pipeline_mode=pl.Buffered(1)),
                pl.BlockSpec((1, N_PAD), lambda i: (0, 0),
                             pipeline_mode=pl.Buffered(1)),
            ],
            out_specs=pl.BlockSpec((tile_b, N_PAD), lambda i: (i, 0)),
        ),
        compiler_params=pltpu.CompilerParams(
            # Batch tiles are independent -> parallel (v7x shards over 2 TCs).
            dimension_semantics=("parallel",),
            vmem_limit_bytes=VMEM_LIMIT_BYTES,
        ),
        cost_estimate=cost,
    )(x, w_p, b_p)

    return out[:, :OUT_FEATURES]


def init_params(key):
    """Deterministic init matching torch.nn.Linear(1000, 2) shapes/bounds."""
    kw, kb = jax.random.split(key)
    bound = 1.0 / (IN_FEATURES ** 0.5)
    weight = jax.random.uniform(
        kw, (OUT_FEATURES, IN_FEATURES), jnp.float32, -bound, bound
    )
    bias = jax.random.uniform(kb, (OUT_FEATURES,), jnp.float32, -bound, bound)
    return weight, bias


if __name__ == "__main__":
    key = jax.random.PRNGKey(0)
    k_in, k_param, k_big = jax.random.split(key, 3)

    weight, bias = init_params(k_param)
    w_p, b_p = prepare_params(weight, bias)   # built once, outside per-call path

    # Small-batch case (the module's typical use).
    batch = 2
    x = jax.random.normal(k_in, (batch, IN_FEATURES), jnp.float32)
    y_pred = linear_classification_forward(x, w_p, b_p)
    jax.block_until_ready(y_pred)
    y_ref = jnp.dot(x, weight.T, precision=jax.lax.Precision.HIGHEST) + bias
    assert y_pred.shape == (batch, OUT_FEATURES)
    assert y_pred.dtype == jnp.float32
    assert jnp.allclose(y_pred, y_ref, atol=5e-3, rtol=5e-3)

    # Larger, non-tile-aligned batch: exercises the ragged 2-tile grid path
    # (tile_b = 504, grid = 2 -> both v7x TensorCores get a tile).
    big_batch = 1000
    xb = jax.random.normal(k_big, (big_batch, IN_FEATURES), jnp.float32)
    yb = linear_classification_forward(xb, w_p, b_p)
    jax.block_until_ready(yb)
    yb_ref = jnp.dot(xb, weight.T, precision=jax.lax.Precision.HIGHEST) + bias
    assert yb.shape == (big_batch, OUT_FEATURES)
    assert jnp.allclose(yb, yb_ref, atol=5e-3, rtol=5e-3)

    # Optional reduced-writeback path: bf16 logits (f32 accumulation inside).
    yb16 = linear_classification_forward(xb, w_p, b_p, out_dtype=jnp.bfloat16)
    jax.block_until_ready(yb16)
    assert yb16.dtype == jnp.bfloat16
    assert jnp.allclose(yb16.astype(jnp.float32), yb_ref, atol=3e-2, rtol=3e-2)

    print("KERNEL_OK")
</pallas_src>

<mosaic_0001>
module attributes {stable_mosaic.version = 11 : i64} {
  func.func @_linear_kernel(%arg0: i32, %arg1: memref<8x1000xf32, #tpu.memory_space<vmem>>, %arg2: memref<1000x128xf32, #tpu.memory_space<vmem>>, %arg3: memref<1x128xf32, #tpu.memory_space<vmem>>, %arg4: memref<8x128xf32, #tpu.memory_space<vmem>>) attributes {dimension_semantics = [#tpu.dimension_semantics<parallel>], iteration_bounds = array<i64: 1>, scalar_prefetch = 0 : i64, scratch_operands = 0 : i64, tpu.core_type = #tpu.core_type<tc>, window_params = [{transform_indices = @transform_0, window_bounds = array<i64: 8, 1000>}, {pipeline_mode = #tpu.pipeline_mode<synchronous>, transform_indices = @transform_1, window_bounds = array<i64: 1000, 128>}, {pipeline_mode = #tpu.pipeline_mode<synchronous>, transform_indices = @transform_2, window_bounds = array<i64: 1, 128>}, {transform_indices = @transform_3, window_bounds = array<i64: 8, 128>}]} {
    %c0 = arith.constant 0 : index
    %c0_0 = arith.constant 0 : index
    %0 = vector.load %arg1[%c0, %c0_0] : memref<8x1000xf32, #tpu.memory_space<vmem>>, vector<8x1000xf32>
    %c0_1 = arith.constant 0 : index
    %c0_2 = arith.constant 0 : index
    %1 = vector.load %arg2[%c0_1, %c0_2] : memref<1000x128xf32, #tpu.memory_space<vmem>>, vector<1000x128xf32>
    %cst = arith.constant dense<0.000000e+00> : vector<8x128xf32>
    %2 = tpu.matmul %0, %1, %cst {dimension_numbers = #tpu.dot_dimension_numbers<[1], [0], [0], [1], [0, 0, 1, 1], [], []>} : vector<8x1000xf32>, vector<1000x128xf32>, vector<8x128xf32> -> vector<8x128xf32>
    %c0_3 = arith.constant 0 : index
    %c0_4 = arith.constant 0 : index
    %3 = vector.load %arg3[%c0_3, %c0_4] : memref<1x128xf32, #tpu.memory_space<vmem>>, vector<1x128xf32>
    %4 = vector.broadcast %3 : vector<1x128xf32> to vector<8x128xf32>
    %5 = arith.addf %2, %4 : vector<8x128xf32>
    %c0_5 = arith.constant 0 : index
    %c0_6 = arith.constant 0 : index
    %6 = vector.load %arg4[%c0_5, %c0_6] : memref<8x128xf32, #tpu.memory_space<vmem>>, vector<8x128xf32>
    tpu.vector_store %arg4[%c0_5, %c0_6], %5 {strides = array<i32>} : memref<8x128xf32, #tpu.memory_space<vmem>>, vector<8x128xf32>,
    return
  }
  func.func @transform_0(%arg0: i32) -> (i32, i32) {
    %c0_i32 = arith.constant 0 : i32
    %c0_i32_0 = arith.constant 0 : i32
    return %arg0, %c0_i32 : i32, i32
  }
  func.func @transform_1(%arg0: i32) -> (i32, i32) {
    %c0_i32 = arith.constant 0 : i32
    %c0_i32_0 = arith.constant 0 : i32
    %c0_i32_1 = arith.constant 0 : i32
    return %c0_i32, %c0_i32_0 : i32, i32
  }
  func.func @transform_2(%arg0: i32) -> (i32, i32) {
    %c0_i32 = arith.constant 0 : i32
    %c0_i32_0 = arith.constant 0 : i32
    %c0_i32_1 = arith.constant 0 : i32
    return %c0_i32, %c0_i32_0 : i32, i32
  }
  func.func @transform_3(%arg0: i32) -> (i32, i32) {
    %c0_i32 = arith.constant 0 : i32
    %c0_i32_0 = arith.constant 0 : i32
    return %arg0, %c0_i32 : i32, i32
  }
}

</mosaic_0001>

<llo_original>
// kernel: linear_classification_forward.1
$region0: #{linear_classification_forward.1}
  #allocation0 [shape = 'u32[]', space=smem, size = 0x4, offset = 0x4, fixed_abs, tag = 'smem constant byte address 0x4 - core index']
  #allocation1 [shape = 'u32[144,128]{1,0:T(1,128)}', space=vmem, size = 0x12000, scoped, tag = 'internal scratch']
  %s0 = inlined_call_operand.hbm [shape: f32[2,1000], index: 0, kind: input, shape index: {}]
  %s1 = inlined_call_operand.hbm [shape: f32[1000,128], index: 1, kind: input, shape index: {}]
  %s2 = inlined_call_operand.vmem [shape: f32[1,128], index: 2, kind: input, shape index: {}]
  %s3 = inlined_call_operand.hbm [shape: f32[2,128], index: 3, kind: output, shape index: {}]
  %s4 = sld [smem:[#allocation0]]
  $region30: #{linear_classification_forward.1} parent=0
    _
  %s6 = ssub.s32 1, %s4
  %s7 = scalar_select 0, %s6, %s4
  $region1: #{linear_classification_forward.1} parent=0
    #allocation2 [shape = 'u8[32768]{0}', space=vmem, size = 0x8000, scoped, tag = 'input window, operand 0, single buffered']
    #allocation3 [shape = 's32[1]{0}', space=sflag, size = 0x4, scoped, tag = 'scoped memory for linear_classification_forward.1']
    #allocation4 [shape = 's32[1]{0}', space=sflag, size = 0x4, scoped, tag = 'scoped memory for linear_classification_forward.1']
    #allocation5 [shape = 'u8[512000]{0}', space=vmem, size = 0x7d000, scoped, tag = 'input window, operand 1, single buffered']
    #allocation6 [shape = 's32[1]{0}', space=sflag, size = 0x4, scoped, tag = 'scoped memory for linear_classification_forward.1']
    #allocation7 [shape = 'u8[4096]{0}', space=vmem, size = 0x1000, scoped, tag = 'output window, operand 0, single buffered']
    %8 = vsyncpa [#allocation3], 0
    %9 = vsyncpa [#allocation6], 0
    %10 = vsyncpa [#allocation4], 0
    // Predicated region
    $region2: #{linear_classification_forward.1} parent=1 // pred_check
      _
    $region3: #{linear_classification_forward.1} parent=1 // pred_check_branch
      %12 = sbr.rel (0) target = $region5
    $region4: #{linear_classification_forward.1} parent=1 // pred_region
      %s14 = ssub.s32 1024, 256
      %15 = vsyncadd [#allocation3], %s14
      %s16 = sshll.u32 [#allocation2], 4
      %s17 = int_to_ptr.vmem [resolvable:$true] %s16
      %22 = dma.hbm_to_vmem [thread:$0]  %s0, 256, %s17, [#allocation3], 256, 256, 16
    $region5: #{linear_classification_forward.1} parent=1 // pred_fallthru
      _
    // Predicated region
    $region6: #{linear_classification_forward.1} parent=1 // pred_check
      _
    $region7: #{linear_classification_forward.1} parent=1 // pred_check_branch
      %24 = sbr.rel (0) target = $region9
    $region8: #{linear_classification_forward.1} parent=1 // pred_region
      %s26 = ssub.s32 16000, 16000
      %27 = vsyncadd [#allocation6], %s26
      %s28 = sshll.u32 [#allocation5], 4
      %s29 = int_to_ptr.vmem [resolvable:$true] %s28
      %34 = dma.hbm_to_vmem [thread:$0]  %s1, 16000, %s29, [#allocation6], 128, 128, 8
    $region9: #{linear_classification_forward.1} parent=1 // pred_fallthru
      _
    // Predicated region
    $region10: #{linear_classification_forward.1} parent=1 // pred_check
      _
    $region11: #{linear_classification_forward.1} parent=1 // pred_check_branch
      %36 = sbr.rel (0) target = $region13
    $region12: #{linear_classification_forward.1} parent=1 // pred_region
      _
    $region13: #{linear_classification_forward.1} parent=1 // pred_fallthru
      _
    // Predicated region
    $region14: #{linear_classification_forward.1} parent=1 // pred_check
      _
    $region15: #{linear_classification_forward.1} parent=1 // pred_check_branch
      %38 = sbr.rel (0) target = $region17
    $region16: #{linear_classification_forward.1} parent=1 // pred_region
      %39 = dma.done [#allocation3], 1024
    $region17: #{linear_classification_forward.1} parent=1 // pred_fallthru
      _
    // Predicated region
    $region18: #{linear_classification_forward.1} parent=1 // pred_check
      _
    $region19: #{linear_classification_forward.1} parent=1 // pred_check_branch
      %41 = sbr.rel (0) target = $region21
    $region20: #{linear_classification_forward.1} parent=1 // pred_region
      %42 = dma.done [#allocation6], 16000
    $region21: #{linear_classification_forward.1} parent=1 // pred_fallthru
      _
    %v43 = vld [vmem:[#allocation2] sm:$0xff]
    %v44 = vld [vmem:[#allocation2 + $0x8] sm:$0xff]
    %v45 = vld [vmem:[#allocation2 + $0x10] sm:$0xff]
    %v46 = vld [vmem:[#allocation2 + $0x18] sm:$0xff]
    %v47 = vld [vmem:[#allocation2 + $0x20] sm:$0xff]
    %v48 = vld [vmem:[#allocation2 + $0x28] sm:$0xff]
    %v49 = vld [vmem:[#allocation2 + $0x30] sm:$0xff]
    %v50 = vld [vmem:[#allocation2 + $0x38] sm:$0xff]
    %v51 = vld [vmem:[#allocation5] sm:$0xff]
    %v52 = vld [vmem:[#allocation5 + $0x8] sm:$0xff]
    %v53 = vld [vmem:[#allocation5 + $0x10] sm:$0xff]
    %v54 = vld [vmem:[#allocation5 + $0x18] sm:$0xff]
    %v55 = vld [vmem:[#allocation5 + $0x20] sm:$0xff]
    %v56 = vld [vmem:[#allocation5 + $0x28] sm:$0xff]
    %v57 = vld [vmem:[#allocation5 + $0x30] sm:$0xff]
    %v58 = vld [vmem:[#allocation5 + $0x38] sm:$0xff]
    %v59 = vld [vmem:[#allocation5 + $0x40] sm:$0xff]
    %v60 = vld [vmem:[#allocation5 + $0x48] sm:$0xff]
    %v61 = vld [vmem:[#allocation5 + $0x50] sm:$0xff]
    %v62 = vld [vmem:[#allocation5 + $0x58] sm:$0xff]
    %v63 = vld [vmem:[#allocation5 + $0x60] sm:$0xff]
    %v64 = vld [vmem:[#allocation5 + $0x68] sm:$0xff]
    %v65 = vld [vmem:[#allocation5 + $0x70] sm:$0xff]
    %v66 = vld [vmem:[#allocation5 + $0x78] sm:$0xff]
    %v67 = vld [vmem:[#allocation5 + $0x80] sm:$0xff]
    %v68 = vld [vmem:[#allocation5 + $0x88] sm:$0xff]
    %v69 = vld [vmem:[#allocation5 + $0x90] sm:$0xff]
    %v70 = vld [vmem:[#allocation5 + $0x98] sm:$0xff]
    %v71 = vld [vmem:[#allocation5 + $0xa0] sm:$0xff]
    %v72 = vld [vmem:[#allocation5 + $0xa8] sm:$0xff]
    %v73 = vld [vmem:[#allocation5 + $0xb0] sm:$0xff]
    %v74 = vld [vmem:[#allocation5 + $0xb8] sm:$0xff]
    %v75 = vld [vmem:[#allocation5 + $0xc0] sm:$0xff]
    %v76 = vld [vmem:[#allocation5 + $0xc8] sm:$0xff]
    %v77 = vld [vmem:[#allocation5 + $0xd0] sm:$0xff]
    %v78 = vld [vmem:[#allocation5 + $0xd8] sm:$0xff]
    %v79 = vld [vmem:[#allocation5 + $0xe0] sm:$0xff]
    %v80 = vld [vmem:[#allocation5 + $0xe8] sm:$0xff]
    %v81 = vld [vmem:[#allocation5 + $0xf0] sm:$0xff]
    %v82 = vld [vmem:[#allocation5 + $0xf8] sm:$0xff]
    %v83 = vld [vmem:[#allocation5 + $0x100] sm:$0xff]
    %v84 = vld [vmem:[#allocation5 + $0x108] sm:$0xff]
    %v85 = vld [vmem:[#allocation5 + $0x110] sm:$0xff]
    %v86 = vld [vmem:[#allocation5 + $0x118] sm:$0xff]
    %v87 = vld [vmem:[#allocation5 + $0x120] sm:$0xff]
    %v88 = vld [vmem:[#allocation5 + $0x128] sm:$0xff]
    %v89 = vld [vmem:[#allocation5 + $0x130] sm:$0xff]
    %v90 = vld [vmem:[#allocation5 + $0x138] sm:$0xff]
    %v91 = vld [vmem:[#allocation5 + $0x140] sm:$0xff]
    %v92 = vld [vmem:[#allocation5 + $0x148] sm:$0xff]
    %v93 = vld [vmem:[#allocation5 + $0x150] sm:$0xff]
    %v94 = vld [vmem:[#allocation5 + $0x158] sm:$0xff]
    %v95 = vld [vmem:[#allocation5 + $0x160] sm:$0xff]
    %v96 = vld [vmem:[#allocation5 + $0x168] sm:$0xff]
    %v97 = vld [vmem:[#allocation5 + $0x170] sm:$0xff]
    %v98 = vld [vmem:[#allocation5 + $0x178] sm:$0xff]
    %v99 = vld [vmem:[#allocation5 + $0x180] sm:$0xff]
    %v100 = vld [vmem:[#allocation5 + $0x188] sm:$0xff]
    %v101 = vld [vmem:[#allocation5 + $0x190] sm:$0xff]
    %v102 = vld [vmem:[#allocation5 + $0x198] sm:$0xff]
    %v103 = vld [vmem:[#allocation5 + $0x1a0] sm:$0xff]
    %v104 = vld [vmem:[#allocation5 + $0x1a8] sm:$0xff]
    %v105 = vld [vmem:[#allocation5 + $0x1b0] sm:$0xff]
    %v106 = vld [vmem:[#allocation5 + $0x1b8] sm:$0xff]
    %v107 = vld [vmem:[#allocation5 + $0x1c0] sm:$0xff]
    %v108 = vld [vmem:[#allocation5 + $0x1c8] sm:$0xff]
    %v109 = vld [vmem:[#allocation5 + $0x1d0] sm:$0xff]
    %v110 = vld [vmem:[#allocation5 + $0x1d8] sm:$0xff]
    %v111 = vld [vmem:[#allocation5 + $0x1e0] sm:$0xff]
    %v112 = vld [vmem:[#allocation5 + $0x1e8] sm:$0xff]
    %v113 = vld [vmem:[#allocation5 + $0x1f0] sm:$0xff]
    %v114 = vld [vmem:[#allocation5 + $0x1f8] sm:$0xff]
    %v115 = vld [vmem:[#allocation5 + $0x200] sm:$0xff]
    %v116 = vld [vmem:[#allocation5 + $0x208] sm:$0xff]
    %v117 = vld [vmem:[#allocation5 + $0x210] sm:$0xff]
    %v118 = vld [vmem:[#allocation5 + $0x218] sm:$0xff]
    %v119 = vld [vmem:[#allocation5 + $0x220] sm:$0xff]
    %v120 = vld [vmem:[#allocation5 + $0x228] sm:$0xff]
    %v121 = vld [vmem:[#allocation5 + $0x230] sm:$0xff]
    %v122 = vld [vmem:[#allocation5 + $0x238] sm:$0xff]
    %v123 = vld [vmem:[#allocation5 + $0x240] sm:$0xff]
    %v124 = vld [vmem:[#allocation5 + $0x248] sm:$0xff]
    %v125 = vld [vmem:[#allocation5 + $0x250] sm:$0xff]
    %v126 = vld [vmem:[#allocation5 + $0x258] sm:$0xff]
    %v127 = vld [vmem:[#allocation5 + $0x260] sm:$0xff]
    %v128 = vld [vmem:[#allocation5 + $0x268] sm:$0xff]
    %v129 = vld [vmem:[#allocation5 + $0x270] sm:$0xff]
    %v130 = vld [vmem:[#allocation5 + $0x278] sm:$0xff]
    %v131 = vld [vmem:[#allocation5 + $0x280] sm:$0xff]
    %v132 = vld [vmem:[#allocation5 + $0x288] sm:$0xff]
    %v133 = vld [vmem:[#allocation5 + $0x290] sm:$0xff]
    %v134 = vld [vmem:[#allocation5 + $0x298] sm:$0xff]
    %v135 = vld [vmem:[#allocation5 + $0x2a0] sm:$0xff]
    %v136 = vld [vmem:[#allocation5 + $0x2a8] sm:$0xff]
    %v137 = vld [vmem:[#allocation5 + $0x2b0] sm:$0xff]
    %v138 = vld [vmem:[#allocation5 + $0x2b8] sm:$0xff]
    %v139 = vld [vmem:[#allocation5 + $0x2c0] sm:$0xff]
    %v140 = vld [vmem:[#allocation5 + $0x2c8] sm:$0xff]
    %v141 = vld [vmem:[#allocation5 + $0x2d0] sm:$0xff]
    %v142 = vld [vmem:[#allocation5 + $0x2d8] sm:$0xff]
    %v143 = vld [vmem:[#allocation5 + $0x2e0] sm:$0xff]
    %v144 = vld [vmem:[#allocation5 + $0x2e8] sm:$0xff]
    %v145 = vld [vmem:[#allocation5 + $0x2f0] sm:$0xff]
    %v146 = vld [vmem:[#allocation5 + $0x2f8] sm:$0xff]
    %v147 = vld [vmem:[#allocation5 + $0x300] sm:$0xff]
    %v148 = vld [vmem:[#allocation5 + $0x308] sm:$0xff]
    %v149 = vld [vmem:[#allocation5 + $0x310] sm:$0xff]
    %v150 = vld [vmem:[#allocation5 + $0x318] sm:$0xff]
    %v151 = vld [vmem:[#allocation5 + $0x320] sm:$0xff]
    %v152 = vld [vmem:[#allocation5 + $0x328] sm:$0xff]
    %v153 = vld [vmem:[#allocation5 + $0x330] sm:$0xff]
    %v154 = vld [vmem:[#allocation5 + $0x338] sm:$0xff]
    %v155 = vld [vmem:[#allocation5 + $0x340] sm:$0xff]
    %v156 = vld [vmem:[#allocation5 + $0x348] sm:$0xff]
    %v157 = vld [vmem:[#allocation5 + $0x350] sm:$0xff]
    %v158 = vld [vmem:[#allocation5 + $0x358] sm:$0xff]
    %v159 = vld [vmem:[#allocation5 + $0x360] sm:$0xff]
    %v160 = vld [vmem:[#allocation5 + $0x368] sm:$0xff]
    %v161 = vld [vmem:[#allocation5 + $0x370] sm:$0xff]
    %v162 = vld [vmem:[#allocation5 + $0x378] sm:$0xff]
    %v163 = vld [vmem:[#allocation5 + $0x380] sm:$0xff]
    %v164 = vld [vmem:[#allocation5 + $0x388] sm:$0xff]
    %v165 = vld [vmem:[#allocation5 + $0x390] sm:$0xff]
    %v166 = vld [vmem:[#allocation5 + $0x398] sm:$0xff]
    %v167 = vld [vmem:[#allocation5 + $0x3a0] sm:$0xff]
    %v168 = vld [vmem:[#allocation5 + $0x3a8] sm:$0xff]
    %v169 = vld [vmem:[#allocation5 + $0x3b0] sm:$0xff]
    %v170 = vld [vmem:[#allocation5 + $0x3b8] sm:$0xff]
    %v171 = vld [vmem:[#allocation5 + $0x3c0] sm:$0xff]
    %v172 = vld [vmem:[#allocation5 + $0x3c8] sm:$0xff]
    %v173 = vld [vmem:[#allocation5 + $0x3d0] sm:$0xff]
    %v174 = vld [vmem:[#allocation5 + $0x3d8] sm:$0xff]
    %v175 = vld [vmem:[#allocation5 + $0x3e0] sm:$0xff]
    %v176 = vld [vmem:[%s2] sm:$0x1]
    %v178 = vlaneseq
    %v179 = vshrl.u32 %v178, 7
    %v180 = vsub.s32 0, %v179
    %v181 = vrot.slane %v176, %v180
    %v191 = vcombine.low %v43, %v45
    %v192 = vcombine.high %v43, %v45
    %v193 = vcombine.low %v47, %v49
    %v194 = vcombine.high %v47, %v49
    %v196 = vunpack.c.l.s4 1983009808
    %v197 = vunpack.c.0.s8 %v196
    %v198 = vlaneseq
    %v199 = vshrl.u32 %v198, 7
    %v200 = vsub.s32 %v197, %v199
    %v201 = vrot.slane %v191, %v200
    %v203 = vunpack.c.l.s4 1983009808
    %v204 = vunpack.c.0.s8 %v203
    %v205 = vlaneseq
    %v206 = vshrl.u32 %v205, 7
    %v207 = vsub.s32 %v204, %v206
    %v208 = vrot.slane %v192, %v207
    %v210 = vunpack.c.l.s4 1983009808
    %v211 = vunpack.c.0.s8 %v210
    %v212 = vlaneseq
    %v213 = vshrl.u32 %v212, 7
    %v214 = vsub.s32 %v211, %v213
    %v215 = vrot.slane %v193, %v214
    %v217 = vunpack.c.l.s4 1983009808
    %v218 = vunpack.c.0.s8 %v217
    %v219 = vlaneseq
    %v220 = vshrl.u32 %v219, 7
    %v221 = vsub.s32 %v218, %v220
    %v222 = vrot.slane %v194, %v221
    %v223 = vcombine.low %v201, %v215
    %v224 = vcombine.high %v201, %v215
    %v225 = vcombine.low %v208, %v222
    %v226 = vcombine.high %v208, %v222
    %v227 = vcombine.low %v44, %v46
    %v228 = vcombine.high %v44, %v46
    %v229 = vcombine.low %v48, %v50
    %v230 = vcombine.high %v48, %v50
    %v232 = vunpack.c.l.s4 1983009808
    %v233 = vunpack.c.0.s8 %v232
    %v234 = vlaneseq
    %v235 = vshrl.u32 %v234, 7
    %v236 = vsub.s32 %v233, %v235
    %v237 = vrot.slane %v227, %v236
    %v239 = vunpack.c.l.s4 1983009808
    %v240 = vunpack.c.0.s8 %v239
    %v241 = vlaneseq
    %v242 = vshrl.u32 %v241, 7
    %v243 = vsub.s32 %v240, %v242
    %v244 = vrot.slane %v228, %v243
    %v246 = vunpack.c.l.s4 1983009808
    %v247 = vunpack.c.0.s8 %v246
    %v248 = vlaneseq
    %v249 = vshrl.u32 %v248, 7
    %v250 = vsub.s32 %v247, %v249
    %v251 = vrot.slane %v229, %v250
    %v253 = vunpack.c.l.s4 1983009808
    %v254 = vunpack.c.0.s8 %v253
    %v255 = vlaneseq
    %v256 = vshrl.u32 %v255, 7
    %v257 = vsub.s32 %v254, %v256
    %v258 = vrot.slane %v230, %v257
    %v259 = vcombine.low %v237, %v251
    %v260 = vcombine.high %v237, %v251
    %v261 = vcombine.low %v244, %v258
    %v262 = vcombine.high %v244, %v258
    %vm270 = vcmask 850944
    %v271 = vsel %vm270, %v262, 0
    %273 = vmatprep.subr.mxu0 0.0
    %274 = vmatpush1.msra.mxu0 %v51
    %275 = vmatprep.subr.mxu0 0.0
    %276 = vmatpush1.msra.mxu0 %v52
    %277 = vmatprep.subr.mxu0 0.0
    %278 = vmatpush1.msra.mxu0 %v53
    %279 = vmatprep.subr.mxu0 0.0
    %280 = vmatpush1.msra.mxu0 %v54
    %281 = vmatprep.subr.mxu0 0.0
    %282 = vmatpush1.msra.mxu0 %v55
    %283 = vmatprep.subr.mxu0 0.0
    %284 = vmatpush1.msra.mxu0 %v56
    %285 = vmatprep.subr.mxu0 0.0
    %286 = vmatpush1.msra.mxu0 %v57
    %287 = vmatprep.subr.mxu0 0.0
    %288 = vmatpush1.msra.mxu0 %v58
    %289 = vmatprep.subr.mxu0 0.0
    %290 = vmatpush1.msra.mxu0 %v59
    %291 = vmatprep.subr.mxu0 0.0
    %292 = vmatpush1.msra.mxu0 %v60
    %293 = vmatprep.subr.mxu0 0.0
    %294 = vmatpush1.msra.mxu0 %v61
    %295 = vmatprep.subr.mxu0 0.0
    %296 = vmatpush1.msra.mxu0 %v62
    %297 = vmatprep.subr.mxu0 0.0
    %298 = vmatpush1.msra.mxu0 %v63
    %299 = vmatprep.subr.mxu0 0.0
    %300 = vmatpush1.msra.mxu0 %v64
    %301 = vmatprep.subr.mxu0 0.0
    %302 = vmatpush1.msra.mxu0 %v65
    %303 = vmatprep.subr.mxu0 0.0
    %304 = vmatpush1.msra.mxu0 %v66
    %305 = vmatprep.subr.mxu0 0.0
    %306 = vmatpush1.msra.mxu0 %v67
    %307 = vmatprep.subr.mxu0 0.0
    %308 = vmatpush1.msra.mxu0 %v68
    %309 = vmatprep.subr.mxu0 0.0
    %310 = vmatpush1.msra.mxu0 %v69
    %311 = vmatprep.subr.mxu0 0.0
    %312 = vmatpush1.msra.mxu0 %v70
    %313 = vmatprep.subr.mxu0 0.0
    %314 = vmatpush1.msra.mxu0 %v71
    %315 = vmatprep.subr.mxu0 0.0
    %316 = vmatpush1.msra.mxu0 %v72
    %317 = vmatprep.subr.mxu0 0.0
    %318 = vmatpush1.msra.mxu0 %v73
    %319 = vmatprep.subr.mxu0 0.0
    %320 = vmatpush1.msra.mxu0 %v74
    %321 = vmatprep.subr.mxu0 0.0
    %322 = vmatpush1.msra.mxu0 %v75
    %323 = vmatprep.subr.mxu0 0.0
    %324 = vmatpush1.msra.mxu0 %v76
    %325 = vmatprep.subr.mxu0 0.0
    %326 = vmatpush1.msra.mxu0 %v77
    %327 = vmatprep.subr.mxu0 0.0
    %328 = vmatpush1.msra.mxu0 %v78
    %329 = vmatprep.subr.mxu0 0.0
    %330 = vmatpush1.msra.mxu0 %v79
    %331 = vmatprep.subr.mxu0 0.0
    %332 = vmatpush1.msra.mxu0 %v80
    %333 = vmatprep.subr.mxu0 0.0
    %334 = vmatpush1.msra.mxu0 %v81
    %335 = vmatprep.subr.mxu0 0.0
    %336 = vmatpush1.msra.mxu0 %v82
    %337 = vmatprep.mubr.f32.mxu0 %v224
    %338 = vmatmul.mubr.f32.gmra.mrb[0].mxu0 %v223
    %v339 = vpop.f32.mrb[0].mxu0
    %v340 = vadd.f32 %v181, %v339
    %v341 = vpop.f32.mrb[0].mxu0
    %342 = vdwg.mxu0
    %343 = vmatprep.subr.mxu0 0.0
    %344 = vmatpush1.msra.mxu0 %v83
    %345 = vmatprep.subr.mxu0 0.0
    %346 = vmatpush1.msra.mxu0 %v84
    %347 = vmatprep.subr.mxu0 0.0
    %348 = vmatpush1.msra.mxu0 %v85
    %349 = vmatprep.subr.mxu0 0.0
    %350 = vmatpush1.msra.mxu0 %v86
    %351 = vmatprep.subr.mxu0 0.0
    %352 = vmatpush1.msra.mxu0 %v87
    %353 = vmatprep.subr.mxu0 0.0
    %354 = vmatpush1.msra.mxu0 %v88
    %355 = vmatprep.subr.mxu0 0.0
    %356 = vmatpush1.msra.mxu0 %v89
    %357 = vmatprep.subr.mxu0 0.0
    %358 = vmatpush1.msra.mxu0 %v90
    %359 = vmatprep.subr.mxu0 0.0
    %360 = vmatpush1.msra.mxu0 %v91
    %361 = vmatprep.subr.mxu0 0.0
    %362 = vmatpush1.msra.mxu0 %v92
    %363 = vmatprep.subr.mxu0 0.0
    %364 = vmatpush1.msra.mxu0 %v93
    %365 = vmatprep.subr.mxu0 0.0
    %366 = vmatpush1.msra.mxu0 %v94
    %367 = vmatprep.subr.mxu0 0.0
    %368 = vmatpush1.msra.mxu0 %v95
    %369 = vmatprep.subr.mxu0 0.0
    %370 = vmatpush1.msra.mxu0 %v96
    %371 = vmatprep.subr.mxu0 0.0
    %372 = vmatpush1.msra.mxu0 %v97
    %373 = vmatprep.subr.mxu0 0.0
    %374 = vmatpush1.msra.mxu0 %v98
    %375 = vmatprep.subr.mxu0 0.0
    %376 = vmatpush1.msra.mxu0 %v99
    %377 = vmatprep.subr.mxu0 0.0
    %378 = vmatpush1.msra.mxu0 %v100
    %379 = vmatprep.subr.mxu0 0.0
    %380 = vmatpush1.msra.mxu0 %v101
    %381 = vmatprep.subr.mxu0 0.0
    %382 = vmatpush1.msra.mxu0 %v102
    %383 = vmatprep.subr.mxu0 0.0
    %384 = vmatpush1.msra.mxu0 %v103
    %385 = vmatprep.subr.mxu0 0.0
    %386 = vmatpush1.msra.mxu0 %v104
    %387 = vmatprep.subr.mxu0 0.0
    %388 = vmatpush1.msra.mxu0 %v105
    %389 = vmatprep.subr.mxu0 0.0
    %390 = vmatpush1.msra.mxu0 %v106
    %391 = vmatprep.subr.mxu0 0.0
    %392 = vmatpush1.msra.mxu0 %v107
    %393 = vmatprep.subr.mxu0 0.0
    %394 = vmatpush1.msra.mxu0 %v108
    %395 = vmatprep.subr.mxu0 0.0
    %396 = vmatpush1.msra.mxu0 %v109
    %397 = vmatprep.subr.mxu0 0.0
    %398 = vmatpush1.msra.mxu0 %v110
    %399 = vmatprep.subr.mxu0 0.0
    %400 = vmatpush1.msra.mxu0 %v111
    %401 = vmatprep.subr.mxu0 0.0
    %402 = vmatpush1.msra.mxu0 %v112
    %403 = vmatprep.subr.mxu0 0.0
    %404 = vmatpush1.msra.mxu0 %v113
    %405 = vmatprep.subr.mxu0 0.0
    %406 = vmatpush1.msra.mxu0 %v114
    %407 = vmatprep.mubr.f32.mxu0 %v226
    %408 = vmatmul.mubr.f32.gmra.mrb[0].mxu0 %v225
    %v409 = vpop.f32.mrb[0].mxu0
    %v410 = vadd.f32 %v340, %v409
    %v411 = vpop.f32.mrb[0].mxu0
    %412 = vdwg.mxu0
    %413 = vmatprep.subr.mxu0 0.0
    %414 = vmatpush1.msra.mxu0 %v115
    %415 = vmatprep.subr.mxu0 0.0
    %416 = vmatpush1.msra.mxu0 %v116
    %417 = vmatprep.subr.mxu0 0.0
    %418 = vmatpush1.msra.mxu0 %v117
    %419 = vmatprep.subr.mxu0 0.0
    %420 = vmatpush1.msra.mxu0 %v118
    %421 = vmatprep.subr.mxu0 0.0
    %422 = vmatpush1.msra.mxu0 %v119
    %423 = vmatprep.subr.mxu0 0.0
    %424 = vmatpush1.msra.mxu0 %v120
    %425 = vmatprep.subr.mxu0 0.0
    %426 = vmatpush1.msra.mxu0 %v121
    %427 = vmatprep.subr.mxu0 0.0
    %428 = vmatpush1.msra.mxu0 %v122
    %429 = vmatprep.subr.mxu0 0.0
    %430 = vmatpush1.msra.mxu0 %v123
    %431 = vmatprep.subr.mxu0 0.0
    %432 = vmatpush1.msra.mxu0 %v124
    %433 = vmatprep.subr.mxu0 0.0
    %434 = vmatpush1.msra.mxu0 %v125
    %435 = vmatprep.subr.mxu0 0.0
    %436 = vmatpush1.msra.mxu0 %v126
    %437 = vmatprep.subr.mxu0 0.0
    %438 = vmatpush1.msra.mxu0 %v127
    %439 = vmatprep.subr.mxu0 0.0
    %440 = vmatpush1.msra.mxu0 %v128
    %441 = vmatprep.subr.mxu0 0.0
    %442 = vmatpush1.msra.mxu0 %v129
    %443 = vmatprep.subr.mxu0 0.0
    %444 = vmatpush1.msra.mxu0 %v130
    %445 = vmatprep.subr.mxu0 0.0
    %446 = vmatpush1.msra.mxu0 %v131
    %447 = vmatprep.subr.mxu0 0.0
    %448 = vmatpush1.msra.mxu0 %v132
    %449 = vmatprep.subr.mxu0 0.0
    %450 = vmatpush1.msra.mxu0 %v133
    %451 = vmatprep.subr.mxu0 0.0
    %452 = vmatpush1.msra.mxu0 %v134
    %453 = vmatprep.subr.mxu0 0.0
    %454 = vmatpush1.msra.mxu0 %v135
    %455 = vmatprep.subr.mxu0 0.0
    %456 = vmatpush1.msra.mxu0 %v136
    %457 = vmatprep.subr.mxu0 0.0
    %458 = vmatpush1.msra.mxu0 %v137
    %459 = vmatprep.subr.mxu0 0.0
    %460 = vmatpush1.msra.mxu0 %v138
    %461 = vmatprep.subr.mxu0 0.0
    %462 = vmatpush1.msra.mxu0 %v139
    %463 = vmatprep.subr.mxu0 0.0
    %464 = vmatpush1.msra.mxu0 %v140
    %465 = vmatprep.subr.mxu0 0.0
    %466 = vmatpush1.msra.mxu0 %v141
    %467 = vmatprep.subr.mxu0 0.0
    %468 = vmatpush1.msra.mxu0 %v142
    %469 = vmatprep.subr.mxu0 0.0
    %470 = vmatpush1.msra.mxu0 %v143
    %471 = vmatprep.subr.mxu0 0.0
    %472 = vmatpush1.msra.mxu0 %v144
    %473 = vmatprep.subr.mxu0 0.0
    %474 = vmatpush1.msra.mxu0 %v145
    %475 = vmatprep.subr.mxu0 0.0
    %476 = vmatpush1.msra.mxu0 %v146
    %477 = vmatprep.mubr.f32.mxu0 %v260
    %478 = vmatmul.mubr.f32.gmra.mrb[0].mxu0 %v259
    %v479 = vpop.f32.mrb[0].mxu0
    %v480 = vadd.f32 %v410, %v479
    %v481 = vpop.f32.mrb[0].mxu0
    %482 = vdwg.mxu0
    %483 = vmatprep.subr.mxu0 0.0
    %484 = vmatpush1.msra.mxu0 %v147
    %485 = vmatprep.subr.mxu0 0.0
    %486 = vmatpush1.msra.mxu0 %v148
    %487 = vmatprep.subr.mxu0 0.0
    %488 = vmatpush1.msra.mxu0 %v149
    %489 = vmatprep.subr.mxu0 0.0
    %490 = vmatpush1.msra.mxu0 %v150
    %491 = vmatprep.subr.mxu0 0.0
    %492 = vmatpush1.msra.mxu0 %v151
    %493 = vmatprep.subr.mxu0 0.0
    %494 = vmatpush1.msra.mxu0 %v152
    %495 = vmatprep.subr.mxu0 0.0
    %496 = vmatpush1.msra.mxu0 %v153
    %497 = vmatprep.subr.mxu0 0.0
    %498 = vmatpush1.msra.mxu0 %v154
    %499 = vmatprep.subr.mxu0 0.0
    %500 = vmatpush1.msra.mxu0 %v155
    %501 = vmatprep.subr.mxu0 0.0
    %502 = vmatpush1.msra.mxu0 %v156
    %503 = vmatprep.subr.mxu0 0.0
    %504 = vmatpush1.msra.mxu0 %v157
    %505 = vmatprep.subr.mxu0 0.0
    %506 = vmatpush1.msra.mxu0 %v158
    %507 = vmatprep.subr.mxu0 0.0
    %508 = vmatpush1.msra.mxu0 %v159
    %509 = vmatprep.subr.mxu0 0.0
    %510 = vmatpush1.msra.mxu0 %v160
    %511 = vmatprep.subr.mxu0 0.0
    %512 = vmatpush1.msra.mxu0 %v161
    %513 = vmatprep.subr.mxu0 0.0
    %514 = vmatpush1.msra.mxu0 %v162
    %515 = vmatprep.subr.mxu0 0.0
    %516 = vmatpush1.msra.mxu0 %v163
    %517 = vmatprep.subr.mxu0 0.0
    %518 = vmatpush1.msra.mxu0 %v164
    %519 = vmatprep.subr.mxu0 0.0
    %520 = vmatpush1.msra.mxu0 %v165
    %521 = vmatprep.subr.mxu0 0.0
    %522 = vmatpush1.msra.mxu0 %v166
    %523 = vmatprep.subr.mxu0 0.0
    %524 = vmatpush1.msra.mxu0 %v167
    %525 = vmatprep.subr.mxu0 0.0
    %526 = vmatpush1.msra.mxu0 %v168
    %527 = vmatprep.subr.mxu0 0.0
    %528 = vmatpush1.msra.mxu0 %v169
    %529 = vmatprep.subr.mxu0 0.0
    %530 = vmatpush1.msra.mxu0 %v170
    %531 = vmatprep.subr.mxu0 0.0
    %532 = vmatpush1.msra.mxu0 %v171
    %533 = vmatprep.subr.mxu0 0.0
    %534 = vmatpush1.msra.mxu0 %v172
    %535 = vmatprep.subr.mxu0 0.0
    %536 = vmatpush1.msra.mxu0 %v173
    %537 = vmatprep.subr.mxu0 0.0
    %538 = vmatpush1.msra.mxu0 %v174
    %539 = vmatprep.subr.mxu0 0.0
    %540 = vmatpush1.msra.mxu0 %v175
    %541 = vmatprep.subr.mxu0 0.0
    %542 = vmatpush1.msra.mxu0 0.0
    %543 = vmatprep.subr.mxu0 0.0
    %544 = vmatpush1.msra.mxu0 0.0
    %545 = vmatprep.subr.mxu0 0.0
    %546 = vmatpush1.msra.mxu0 0.0
    %547 = vmatprep.mubr.f32.mxu0 %v271
    %548 = vmatmul.mubr.f32.gmra.mrb[0].mxu0 %v261
    %v549 = vpop.f32.mrb[0].mxu0
    %v550 = vadd.f32 %v480, %v549
    %v551 = vpop.f32.mrb[0].mxu0
    %552 = vdwg.mxu0
    %553 = vst [vmem:[#allocation7] sm:$0xff] %v550
    // Predicated region
    $region22: #{linear_classification_forward.1} parent=1 // pred_check
      _
    $region23: #{linear_classification_forward.1} parent=1 // pred_check_branch
      %555 = sbr.rel (0) target = $region25
    $region24: #{linear_classification_forward.1} parent=1 // pred_region
      %s557 = ssub.s32 128, 32
      %558 = vsyncadd [#allocation4], %s557
      %s559 = sshll.u32 [#allocation7], 4
      %s560 = int_to_ptr.vmem [resolvable:$true] %s559
      %565 = dma.vmem_to_hbm [thread:$0]  %s560, 32, %s3, [#allocation4], 32, 32, 2
    $region25: #{linear_classification_forward.1} parent=1 // pred_fallthru
      _
    // Predicated region
    $region26: #{linear_classification_forward.1} parent=1 // pred_check
      _
    $region27: #{linear_classification_forward.1} parent=1 // pred_check_branch
      %567 = sbr.rel (0) target = $region29
    $region28: #{linear_classification_forward.1} parent=1 // pred_region
      %568 = dma.done [#allocation4], 128
    $region29: #{linear_classification_forward.1} parent=1 // pred_fallthru
      _
    %569 = vsyncpa [#allocation3], 1
    %570 = vsyncpa [#allocation6], 1
    %571 = vsyncpa [#allocation4], 1

</llo_original>
